<compile_context>
chip_gen: v6e
topology: v6e:2x2x1
jax: 0.10.0
libtpu: 0.0.40
codegen_flags: <defaults>
</compile_context>

<pallas_src>
import functools

import jax
import jax.numpy as jnp
from jax import lax
from jax.experimental import pallas as pl
from jax.experimental.pallas import tpu as pltpu


def _center_loss_kernel(tb, d, b_real, needs_mask,
                        labels_sref, feat_ref, centers_hbm, out_ref,
                        gather_ref, sems):
    i = pl.program_id(0)
    base = i * tb

    # Gather the TB needed center rows straight from HBM: one small DMA per
    # row, all in flight simultaneously, each with its own semaphore.
    copies = []
    for r in range(tb):
        lbl = labels_sref[base + r]
        cp = pltpu.make_async_copy(
            centers_hbm.at[pl.ds(lbl, 1)],    # (1, D) row in HBM
            gather_ref.at[pl.ds(r, 1)],       # (1, D) row in VMEM scratch
            sems.at[r],
        )
        cp.start()
        copies.append(cp)
    for cp in copies:
        cp.wait()

    feats = feat_ref[...].astype(jnp.float32)       # (TB, D)
    cents = gather_ref[...].astype(jnp.float32)     # (TB, D)
    diff = feats - cents
    sq = diff * diff

    if needs_mask:  # static decision: zero out padded batch rows
        row_ids = base + lax.broadcasted_iota(jnp.int32, (tb, d), 0)
        sq = jnp.where(row_ids < b_real, sq, 0.0)

    # Per-lane partial sum (sublane reduce only); the cross-lane reduction is
    # deferred to the wrapper -> lane-dense, unmasked stores.
    out_ref[...] = jnp.sum(sq, axis=0, keepdims=True).reshape(1, 1, d)


def center_loss(features, centers, labels, *, tb=None):
    """features: (B, D) float, centers: (C, D) float, labels: (B,) int."""
    b, d = features.shape
    c, d2 = centers.shape
    assert d == d2, (features.shape, centers.shape)

    if tb is None:
        # bf16 packs 16 rows per vreg sublane-wise, f32 packs 8.
        tb = 16 if features.dtype == jnp.bfloat16 else 8
    num_tiles = -(-b // tb)
    padded_b = num_tiles * tb

    # Clamp labels so the row-gather DMA stays in bounds (PyTorch would raise).
    labels_p = jnp.clip(labels.astype(jnp.int32), 0, c - 1)
    feats_p = features
    if padded_b != b:
        feats_p = jnp.pad(features, ((0, padded_b - b), (0, 0)))
        labels_p = jnp.pad(labels_p, (0, padded_b - b))

    itemsize = jnp.dtype(features.dtype).itemsize
    c_itemsize = jnp.dtype(centers.dtype).itemsize

    kernel = functools.partial(_center_loss_kernel, tb, d, b, padded_b != b)

    partials = pl.pallas_call(
        kernel,
        out_shape=jax.ShapeDtypeStruct((num_tiles, 1, d), jnp.float32),
        grid_spec=pltpu.PrefetchScalarGridSpec(
            num_scalar_prefetch=1,                       # labels -> SMEM
            grid=(num_tiles,),
            in_specs=[
                pl.BlockSpec((tb, d), lambda i, lbl: (i, 0)),   # features tile
                pl.BlockSpec(memory_space=pl.ANY),              # centers in HBM
            ],
            out_specs=pl.BlockSpec((1, 1, d), lambda i, lbl: (i, 0, 0)),
            scratch_shapes=[
                pltpu.VMEM((tb, d), centers.dtype),     # gathered center rows
                pltpu.SemaphoreType.DMA((tb,)),
            ],
        ),
        compiler_params=pltpu.CompilerParams(
            dimension_semantics=("parallel",),           # independent tiles
            vmem_limit_bytes=32 * 1024 * 1024,           # safe on v5e/v6e/v7x
        ),
        cost_estimate=pl.CostEstimate(
            flops=3 * b * d,
            transcendentals=0,
            bytes_accessed=(padded_b * d * itemsize       # features
                            + padded_b * d * c_itemsize   # gathered rows
                            + num_tiles * d * 4),         # partial sums
        ),
    )(labels_p, feats_p, centers)

    # Final cross-lane/tile reduction + scale in XLA (tiny).
    return 0.5 * jnp.sum(partials) / b


def center_loss_ref(features, centers, labels):
    batch_centers = centers[labels]
    diff = features.astype(jnp.float32) - batch_centers.astype(jnp.float32)
    return 0.5 * jnp.sum(diff ** 2) / features.shape[0]


if __name__ == "__main__":
    key = jax.random.PRNGKey(0)
    k1, k2, k3, k4, k5, k6 = jax.random.split(key, 6)

    # Case 1: tile-aligned batch (no padding path).
    B, D, C = 8, 128, 10
    features = jax.random.normal(k1, (B, D), dtype=jnp.float32)
    centers = jax.random.normal(k2, (C, D), dtype=jnp.float32)  # randn init
    labels = jax.random.randint(k3, (B,), 0, C, dtype=jnp.int32)
    loss = jax.block_until_ready(center_loss(features, centers, labels))
    ref = center_loss_ref(features, centers, labels)
    assert jnp.allclose(loss, ref, rtol=1e-5, atol=1e-5), (loss, ref)

    # Case 2: ragged batch (multi-tile grid + padded-row masking path).
    B2, D2, C2 = 12, 256, 7
    features2 = jax.random.normal(k4, (B2, D2), dtype=jnp.float32)
    centers2 = jax.random.normal(k5, (C2, D2), dtype=jnp.float32)
    labels2 = jax.random.randint(k6, (B2,), 0, C2, dtype=jnp.int32)
    loss2 = jax.block_until_ready(center_loss(features2, centers2, labels2))
    ref2 = center_loss_ref(features2, centers2, labels2)
    assert jnp.allclose(loss2, ref2, rtol=1e-5, atol=1e-5), (loss2, ref2)

    print("KERNEL_OK")
</pallas_src>

<mosaic_0001>
module attributes {stable_mosaic.version = 11 : i64} {
  func.func @_center_loss_kernel(%arg0: i32, %arg1: memref<8xi32, #tpu.memory_space<smem>>, %arg2: memref<8x128xf32, #tpu.memory_space<vmem>>, %arg3: memref<10x128xf32, #tpu.memory_space<any>>, %arg4: memref<1x1x128xf32, #tpu.memory_space<vmem>>, %arg5: memref<8x128xf32, #tpu.memory_space<vmem>>, %arg6: memref<8x!tpu.dma_semaphore, #tpu.memory_space<semaphore_mem>>) attributes {dimension_semantics = [#tpu.dimension_semantics<parallel>], iteration_bounds = array<i64: 1>, scalar_prefetch = 1 : i64, scratch_operands = 2 : i64, tpu.core_type = #tpu.core_type<tc>, window_params = [{transform_indices = @transform_0, window_bounds = array<i64: 8, 128>}, {}, {transform_indices = @transform_2, window_bounds = array<i64: 1, 1, 128>}]} {
    %c8_i32 = arith.constant 8 : i32
    %0 = arith.muli %arg0, %c8_i32 : i32
    %c0_i32 = arith.constant 0 : i32
    %1 = arith.addi %0, %c0_i32 : i32
    %2 = arith.index_cast %1 : i32 to index
    %3 = memref.load %arg1[%2] : memref<8xi32, #tpu.memory_space<smem>>
    %c0_i32_0 = arith.constant 0 : i32
    %c0_i32_1 = arith.constant 0 : i32
    %4 = tpu.memref_slice %arg3[%3, %c0_i32_1] : memref<10x128xf32, #tpu.memory_space<any>> -> memref<1x128xf32, #tpu.memory_space<any>>
    %c0_i32_2 = arith.constant 0 : i32
    %c0_i32_3 = arith.constant 0 : i32
    %5 = tpu.memref_slice %arg5[%c0_i32_2, %c0_i32_3] : memref<8x128xf32, #tpu.memory_space<vmem>> -> memref<1x128xf32, #tpu.memory_space<vmem>>
    %6 = tpu.memref_slice %arg6[%c0_i32_0] : memref<8x!tpu.dma_semaphore, #tpu.memory_space<semaphore_mem>> -> memref<1x!tpu.dma_semaphore, #tpu.memory_space<semaphore_mem>>
    %7 = tpu.memref_squeeze %6 : memref<1x!tpu.dma_semaphore, #tpu.memory_space<semaphore_mem>> -> memref<!tpu.dma_semaphore, #tpu.memory_space<semaphore_mem>>
    tpu.enqueue_dma source(%4 : memref<1x128xf32, #tpu.memory_space<any>>) target(%5 : memref<1x128xf32, #tpu.memory_space<vmem>>) target_semaphore(%7 : memref<!tpu.dma_semaphore, #tpu.memory_space<semaphore_mem>>)
    %c1_i32 = arith.constant 1 : i32
    %8 = arith.addi %0, %c1_i32 : i32
    %9 = arith.index_cast %8 : i32 to index
    %10 = memref.load %arg1[%9] : memref<8xi32, #tpu.memory_space<smem>>
    %c1_i32_4 = arith.constant 1 : i32
    %c0_i32_5 = arith.constant 0 : i32
    %11 = tpu.memref_slice %arg3[%10, %c0_i32_5] : memref<10x128xf32, #tpu.memory_space<any>> -> memref<1x128xf32, #tpu.memory_space<any>>
    %c1_i32_6 = arith.constant 1 : i32
    %c0_i32_7 = arith.constant 0 : i32
    %12 = tpu.memref_slice %arg5[%c1_i32_6, %c0_i32_7] : memref<8x128xf32, #tpu.memory_space<vmem>> -> memref<1x128xf32, #tpu.memory_space<vmem>>
    %13 = tpu.memref_slice %arg6[%c1_i32_4] : memref<8x!tpu.dma_semaphore, #tpu.memory_space<semaphore_mem>> -> memref<1x!tpu.dma_semaphore, #tpu.memory_space<semaphore_mem>>
    %14 = tpu.memref_squeeze %13 : memref<1x!tpu.dma_semaphore, #tpu.memory_space<semaphore_mem>> -> memref<!tpu.dma_semaphore, #tpu.memory_space<semaphore_mem>>
    tpu.enqueue_dma source(%11 : memref<1x128xf32, #tpu.memory_space<any>>) target(%12 : memref<1x128xf32, #tpu.memory_space<vmem>>) target_semaphore(%14 : memref<!tpu.dma_semaphore, #tpu.memory_space<semaphore_mem>>)
    %c2_i32 = arith.constant 2 : i32
    %15 = arith.addi %0, %c2_i32 : i32
    %16 = arith.index_cast %15 : i32 to index
    %17 = memref.load %arg1[%16] : memref<8xi32, #tpu.memory_space<smem>>
    %c2_i32_8 = arith.constant 2 : i32
    %c0_i32_9 = arith.constant 0 : i32
    %18 = tpu.memref_slice %arg3[%17, %c0_i32_9] : memref<10x128xf32, #tpu.memory_space<any>> -> memref<1x128xf32, #tpu.memory_space<any>>
    %c2_i32_10 = arith.constant 2 : i32
    %c0_i32_11 = arith.constant 0 : i32
    %19 = tpu.memref_slice %arg5[%c2_i32_10, %c0_i32_11] : memref<8x128xf32, #tpu.memory_space<vmem>> -> memref<1x128xf32, #tpu.memory_space<vmem>>
    %20 = tpu.memref_slice %arg6[%c2_i32_8] : memref<8x!tpu.dma_semaphore, #tpu.memory_space<semaphore_mem>> -> memref<1x!tpu.dma_semaphore, #tpu.memory_space<semaphore_mem>>
    %21 = tpu.memref_squeeze %20 : memref<1x!tpu.dma_semaphore, #tpu.memory_space<semaphore_mem>> -> memref<!tpu.dma_semaphore, #tpu.memory_space<semaphore_mem>>
    tpu.enqueue_dma source(%18 : memref<1x128xf32, #tpu.memory_space<any>>) target(%19 : memref<1x128xf32, #tpu.memory_space<vmem>>) target_semaphore(%21 : memref<!tpu.dma_semaphore, #tpu.memory_space<semaphore_mem>>)
    %c3_i32 = arith.constant 3 : i32
    %22 = arith.addi %0, %c3_i32 : i32
    %23 = arith.index_cast %22 : i32 to index
    %24 = memref.load %arg1[%23] : memref<8xi32, #tpu.memory_space<smem>>
    %c3_i32_12 = arith.constant 3 : i32
    %c0_i32_13 = arith.constant 0 : i32
    %25 = tpu.memref_slice %arg3[%24, %c0_i32_13] : memref<10x128xf32, #tpu.memory_space<any>> -> memref<1x128xf32, #tpu.memory_space<any>>
    %c3_i32_14 = arith.constant 3 : i32
    %c0_i32_15 = arith.constant 0 : i32
    %26 = tpu.memref_slice %arg5[%c3_i32_14, %c0_i32_15] : memref<8x128xf32, #tpu.memory_space<vmem>> -> memref<1x128xf32, #tpu.memory_space<vmem>>
    %27 = tpu.memref_slice %arg6[%c3_i32_12] : memref<8x!tpu.dma_semaphore, #tpu.memory_space<semaphore_mem>> -> memref<1x!tpu.dma_semaphore, #tpu.memory_space<semaphore_mem>>
    %28 = tpu.memref_squeeze %27 : memref<1x!tpu.dma_semaphore, #tpu.memory_space<semaphore_mem>> -> memref<!tpu.dma_semaphore, #tpu.memory_space<semaphore_mem>>
    tpu.enqueue_dma source(%25 : memref<1x128xf32, #tpu.memory_space<any>>) target(%26 : memref<1x128xf32, #tpu.memory_space<vmem>>) target_semaphore(%28 : memref<!tpu.dma_semaphore, #tpu.memory_space<semaphore_mem>>)
    %c4_i32 = arith.constant 4 : i32
    %29 = arith.addi %0, %c4_i32 : i32
    %30 = arith.index_cast %29 : i32 to index
    %31 = memref.load %arg1[%30] : memref<8xi32, #tpu.memory_space<smem>>
    %c4_i32_16 = arith.constant 4 : i32
    %c0_i32_17 = arith.constant 0 : i32
    %32 = tpu.memref_slice %arg3[%31, %c0_i32_17] : memref<10x128xf32, #tpu.memory_space<any>> -> memref<1x128xf32, #tpu.memory_space<any>>
    %c4_i32_18 = arith.constant 4 : i32
    %c0_i32_19 = arith.constant 0 : i32
    %33 = tpu.memref_slice %arg5[%c4_i32_18, %c0_i32_19] : memref<8x128xf32, #tpu.memory_space<vmem>> -> memref<1x128xf32, #tpu.memory_space<vmem>>
    %34 = tpu.memref_slice %arg6[%c4_i32_16] : memref<8x!tpu.dma_semaphore, #tpu.memory_space<semaphore_mem>> -> memref<1x!tpu.dma_semaphore, #tpu.memory_space<semaphore_mem>>
    %35 = tpu.memref_squeeze %34 : memref<1x!tpu.dma_semaphore, #tpu.memory_space<semaphore_mem>> -> memref<!tpu.dma_semaphore, #tpu.memory_space<semaphore_mem>>
    tpu.enqueue_dma source(%32 : memref<1x128xf32, #tpu.memory_space<any>>) target(%33 : memref<1x128xf32, #tpu.memory_space<vmem>>) target_semaphore(%35 : memref<!tpu.dma_semaphore, #tpu.memory_space<semaphore_mem>>)
    %c5_i32 = arith.constant 5 : i32
    %36 = arith.addi %0, %c5_i32 : i32
    %37 = arith.index_cast %36 : i32 to index
    %38 = memref.load %arg1[%37] : memref<8xi32, #tpu.memory_space<smem>>
    %c5_i32_20 = arith.constant 5 : i32
    %c0_i32_21 = arith.constant 0 : i32
    %39 = tpu.memref_slice %arg3[%38, %c0_i32_21] : memref<10x128xf32, #tpu.memory_space<any>> -> memref<1x128xf32, #tpu.memory_space<any>>
    %c5_i32_22 = arith.constant 5 : i32
    %c0_i32_23 = arith.constant 0 : i32
    %40 = tpu.memref_slice %arg5[%c5_i32_22, %c0_i32_23] : memref<8x128xf32, #tpu.memory_space<vmem>> -> memref<1x128xf32, #tpu.memory_space<vmem>>
    %41 = tpu.memref_slice %arg6[%c5_i32_20] : memref<8x!tpu.dma_semaphore, #tpu.memory_space<semaphore_mem>> -> memref<1x!tpu.dma_semaphore, #tpu.memory_space<semaphore_mem>>
    %42 = tpu.memref_squeeze %41 : memref<1x!tpu.dma_semaphore, #tpu.memory_space<semaphore_mem>> -> memref<!tpu.dma_semaphore, #tpu.memory_space<semaphore_mem>>
    tpu.enqueue_dma source(%39 : memref<1x128xf32, #tpu.memory_space<any>>) target(%40 : memref<1x128xf32, #tpu.memory_space<vmem>>) target_semaphore(%42 : memref<!tpu.dma_semaphore, #tpu.memory_space<semaphore_mem>>)
    %c6_i32 = arith.constant 6 : i32
    %43 = arith.addi %0, %c6_i32 : i32
    %44 = arith.index_cast %43 : i32 to index
    %45 = memref.load %arg1[%44] : memref<8xi32, #tpu.memory_space<smem>>
    %c6_i32_24 = arith.constant 6 : i32
    %c0_i32_25 = arith.constant 0 : i32
    %46 = tpu.memref_slice %arg3[%45, %c0_i32_25] : memref<10x128xf32, #tpu.memory_space<any>> -> memref<1x128xf32, #tpu.memory_space<any>>
    %c6_i32_26 = arith.constant 6 : i32
    %c0_i32_27 = arith.constant 0 : i32
    %47 = tpu.memref_slice %arg5[%c6_i32_26, %c0_i32_27] : memref<8x128xf32, #tpu.memory_space<vmem>> -> memref<1x128xf32, #tpu.memory_space<vmem>>
    %48 = tpu.memref_slice %arg6[%c6_i32_24] : memref<8x!tpu.dma_semaphore, #tpu.memory_space<semaphore_mem>> -> memref<1x!tpu.dma_semaphore, #tpu.memory_space<semaphore_mem>>
    %49 = tpu.memref_squeeze %48 : memref<1x!tpu.dma_semaphore, #tpu.memory_space<semaphore_mem>> -> memref<!tpu.dma_semaphore, #tpu.memory_space<semaphore_mem>>
    tpu.enqueue_dma source(%46 : memref<1x128xf32, #tpu.memory_space<any>>) target(%47 : memref<1x128xf32, #tpu.memory_space<vmem>>) target_semaphore(%49 : memref<!tpu.dma_semaphore, #tpu.memory_space<semaphore_mem>>)
    %c7_i32 = arith.constant 7 : i32
    %50 = arith.addi %0, %c7_i32 : i32
    %51 = arith.index_cast %50 : i32 to index
    %52 = memref.load %arg1[%51] : memref<8xi32, #tpu.memory_space<smem>>
    %c7_i32_28 = arith.constant 7 : i32
    %c0_i32_29 = arith.constant 0 : i32
    %53 = tpu.memref_slice %arg3[%52, %c0_i32_29] : memref<10x128xf32, #tpu.memory_space<any>> -> memref<1x128xf32, #tpu.memory_space<any>>
    %c7_i32_30 = arith.constant 7 : i32
    %c0_i32_31 = arith.constant 0 : i32
    %54 = tpu.memref_slice %arg5[%c7_i32_30, %c0_i32_31] : memref<8x128xf32, #tpu.memory_space<vmem>> -> memref<1x128xf32, #tpu.memory_space<vmem>>
    %55 = tpu.memref_slice %arg6[%c7_i32_28] : memref<8x!tpu.dma_semaphore, #tpu.memory_space<semaphore_mem>> -> memref<1x!tpu.dma_semaphore, #tpu.memory_space<semaphore_mem>>
    %56 = tpu.memref_squeeze %55 : memref<1x!tpu.dma_semaphore, #tpu.memory_space<semaphore_mem>> -> memref<!tpu.dma_semaphore, #tpu.memory_space<semaphore_mem>>
    tpu.enqueue_dma source(%53 : memref<1x128xf32, #tpu.memory_space<any>>) target(%54 : memref<1x128xf32, #tpu.memory_space<vmem>>) target_semaphore(%56 : memref<!tpu.dma_semaphore, #tpu.memory_space<semaphore_mem>>)
    %c0_i32_32 = arith.constant 0 : i32
    %c0_i32_33 = arith.constant 0 : i32
    %57 = tpu.memref_slice %arg3[%3, %c0_i32_33] : memref<10x128xf32, #tpu.memory_space<any>> -> memref<1x128xf32, #tpu.memory_space<any>>
    %c0_i32_34 = arith.constant 0 : i32
    %c0_i32_35 = arith.constant 0 : i32
    %58 = tpu.memref_slice %arg5[%c0_i32_34, %c0_i32_35] : memref<8x128xf32, #tpu.memory_space<vmem>> -> memref<1x128xf32, #tpu.memory_space<vmem>>
    %59 = tpu.memref_slice %arg6[%c0_i32_32] : memref<8x!tpu.dma_semaphore, #tpu.memory_space<semaphore_mem>> -> memref<1x!tpu.dma_semaphore, #tpu.memory_space<semaphore_mem>>
    %60 = tpu.memref_squeeze %59 : memref<1x!tpu.dma_semaphore, #tpu.memory_space<semaphore_mem>> -> memref<!tpu.dma_semaphore, #tpu.memory_space<semaphore_mem>>
    tpu.wait_dma2 semaphore(%60 : memref<!tpu.dma_semaphore, #tpu.memory_space<semaphore_mem>>) src(%57 : memref<1x128xf32, #tpu.memory_space<any>>) dst(%58 : memref<1x128xf32, #tpu.memory_space<vmem>>)
    %c1_i32_36 = arith.constant 1 : i32
    %c0_i32_37 = arith.constant 0 : i32
    %61 = tpu.memref_slice %arg3[%10, %c0_i32_37] : memref<10x128xf32, #tpu.memory_space<any>> -> memref<1x128xf32, #tpu.memory_space<any>>
    %c1_i32_38 = arith.constant 1 : i32
    %c0_i32_39 = arith.constant 0 : i32
    %62 = tpu.memref_slice %arg5[%c1_i32_38, %c0_i32_39] : memref<8x128xf32, #tpu.memory_space<vmem>> -> memref<1x128xf32, #tpu.memory_space<vmem>>
    %63 = tpu.memref_slice %arg6[%c1_i32_36] : memref<8x!tpu.dma_semaphore, #tpu.memory_space<semaphore_mem>> -> memref<1x!tpu.dma_semaphore, #tpu.memory_space<semaphore_mem>>
    %64 = tpu.memref_squeeze %63 : memref<1x!tpu.dma_semaphore, #tpu.memory_space<semaphore_mem>> -> memref<!tpu.dma_semaphore, #tpu.memory_space<semaphore_mem>>
    tpu.wait_dma2 semaphore(%64 : memref<!tpu.dma_semaphore, #tpu.memory_space<semaphore_mem>>) src(%61 : memref<1x128xf32, #tpu.memory_space<any>>) dst(%62 : memref<1x128xf32, #tpu.memory_space<vmem>>)
    %c2_i32_40 = arith.constant 2 : i32
    %c0_i32_41 = arith.constant 0 : i32
    %65 = tpu.memref_slice %arg3[%17, %c0_i32_41] : memref<10x128xf32, #tpu.memory_space<any>> -> memref<1x128xf32, #tpu.memory_space<any>>
    %c2_i32_42 = arith.constant 2 : i32
    %c0_i32_43 = arith.constant 0 : i32
    %66 = tpu.memref_slice %arg5[%c2_i32_42, %c0_i32_43] : memref<8x128xf32, #tpu.memory_space<vmem>> -> memref<1x128xf32, #tpu.memory_space<vmem>>
    %67 = tpu.memref_slice %arg6[%c2_i32_40] : memref<8x!tpu.dma_semaphore, #tpu.memory_space<semaphore_mem>> -> memref<1x!tpu.dma_semaphore, #tpu.memory_space<semaphore_mem>>
    %68 = tpu.memref_squeeze %67 : memref<1x!tpu.dma_semaphore, #tpu.memory_space<semaphore_mem>> -> memref<!tpu.dma_semaphore, #tpu.memory_space<semaphore_mem>>
    tpu.wait_dma2 semaphore(%68 : memref<!tpu.dma_semaphore, #tpu.memory_space<semaphore_mem>>) src(%65 : memref<1x128xf32, #tpu.memory_space<any>>) dst(%66 : memref<1x128xf32, #tpu.memory_space<vmem>>)
    %c3_i32_44 = arith.constant 3 : i32
    %c0_i32_45 = arith.constant 0 : i32
    %69 = tpu.memref_slice %arg3[%24, %c0_i32_45] : memref<10x128xf32, #tpu.memory_space<any>> -> memref<1x128xf32, #tpu.memory_space<any>>
    %c3_i32_46 = arith.constant 3 : i32
    %c0_i32_47 = arith.constant 0 : i32
    %70 = tpu.memref_slice %arg5[%c3_i32_46, %c0_i32_47] : memref<8x128xf32, #tpu.memory_space<vmem>> -> memref<1x128xf32, #tpu.memory_space<vmem>>
    %71 = tpu.memref_slice %arg6[%c3_i32_44] : memref<8x!tpu.dma_semaphore, #tpu.memory_space<semaphore_mem>> -> memref<1x!tpu.dma_semaphore, #tpu.memory_space<semaphore_mem>>
    %72 = tpu.memref_squeeze %71 : memref<1x!tpu.dma_semaphore, #tpu.memory_space<semaphore_mem>> -> memref<!tpu.dma_semaphore, #tpu.memory_space<semaphore_mem>>
    tpu.wait_dma2 semaphore(%72 : memref<!tpu.dma_semaphore, #tpu.memory_space<semaphore_mem>>) src(%69 : memref<1x128xf32, #tpu.memory_space<any>>) dst(%70 : memref<1x128xf32, #tpu.memory_space<vmem>>)
    %c4_i32_48 = arith.constant 4 : i32
    %c0_i32_49 = arith.constant 0 : i32
    %73 = tpu.memref_slice %arg3[%31, %c0_i32_49] : memref<10x128xf32, #tpu.memory_space<any>> -> memref<1x128xf32, #tpu.memory_space<any>>
    %c4_i32_50 = arith.constant 4 : i32
    %c0_i32_51 = arith.constant 0 : i32
    %74 = tpu.memref_slice %arg5[%c4_i32_50, %c0_i32_51] : memref<8x128xf32, #tpu.memory_space<vmem>> -> memref<1x128xf32, #tpu.memory_space<vmem>>
    %75 = tpu.memref_slice %arg6[%c4_i32_48] : memref<8x!tpu.dma_semaphore, #tpu.memory_space<semaphore_mem>> -> memref<1x!tpu.dma_semaphore, #tpu.memory_space<semaphore_mem>>
    %76 = tpu.memref_squeeze %75 : memref<1x!tpu.dma_semaphore, #tpu.memory_space<semaphore_mem>> -> memref<!tpu.dma_semaphore, #tpu.memory_space<semaphore_mem>>
    tpu.wait_dma2 semaphore(%76 : memref<!tpu.dma_semaphore, #tpu.memory_space<semaphore_mem>>) src(%73 : memref<1x128xf32, #tpu.memory_space<any>>) dst(%74 : memref<1x128xf32, #tpu.memory_space<vmem>>)
    %c5_i32_52 = arith.constant 5 : i32
    %c0_i32_53 = arith.constant 0 : i32
    %77 = tpu.memref_slice %arg3[%38, %c0_i32_53] : memref<10x128xf32, #tpu.memory_space<any>> -> memref<1x128xf32, #tpu.memory_space<any>>
    %c5_i32_54 = arith.constant 5 : i32
    %c0_i32_55 = arith.constant 0 : i32
    %78 = tpu.memref_slice %arg5[%c5_i32_54, %c0_i32_55] : memref<8x128xf32, #tpu.memory_space<vmem>> -> memref<1x128xf32, #tpu.memory_space<vmem>>
    %79 = tpu.memref_slice %arg6[%c5_i32_52] : memref<8x!tpu.dma_semaphore, #tpu.memory_space<semaphore_mem>> -> memref<1x!tpu.dma_semaphore, #tpu.memory_space<semaphore_mem>>
    %80 = tpu.memref_squeeze %79 : memref<1x!tpu.dma_semaphore, #tpu.memory_space<semaphore_mem>> -> memref<!tpu.dma_semaphore, #tpu.memory_space<semaphore_mem>>
    tpu.wait_dma2 semaphore(%80 : memref<!tpu.dma_semaphore, #tpu.memory_space<semaphore_mem>>) src(%77 : memref<1x128xf32, #tpu.memory_space<any>>) dst(%78 : memref<1x128xf32, #tpu.memory_space<vmem>>)
    %c6_i32_56 = arith.constant 6 : i32
    %c0_i32_57 = arith.constant 0 : i32
    %81 = tpu.memref_slice %arg3[%45, %c0_i32_57] : memref<10x128xf32, #tpu.memory_space<any>> -> memref<1x128xf32, #tpu.memory_space<any>>
    %c6_i32_58 = arith.constant 6 : i32
    %c0_i32_59 = arith.constant 0 : i32
    %82 = tpu.memref_slice %arg5[%c6_i32_58, %c0_i32_59] : memref<8x128xf32, #tpu.memory_space<vmem>> -> memref<1x128xf32, #tpu.memory_space<vmem>>
    %83 = tpu.memref_slice %arg6[%c6_i32_56] : memref<8x!tpu.dma_semaphore, #tpu.memory_space<semaphore_mem>> -> memref<1x!tpu.dma_semaphore, #tpu.memory_space<semaphore_mem>>
    %84 = tpu.memref_squeeze %83 : memref<1x!tpu.dma_semaphore, #tpu.memory_space<semaphore_mem>> -> memref<!tpu.dma_semaphore, #tpu.memory_space<semaphore_mem>>
    tpu.wait_dma2 semaphore(%84 : memref<!tpu.dma_semaphore, #tpu.memory_space<semaphore_mem>>) src(%81 : memref<1x128xf32, #tpu.memory_space<any>>) dst(%82 : memref<1x128xf32, #tpu.memory_space<vmem>>)
    %c7_i32_60 = arith.constant 7 : i32
    %c0_i32_61 = arith.constant 0 : i32
    %85 = tpu.memref_slice %arg3[%52, %c0_i32_61] : memref<10x128xf32, #tpu.memory_space<any>> -> memref<1x128xf32, #tpu.memory_space<any>>
    %c7_i32_62 = arith.constant 7 : i32
    %c0_i32_63 = arith.constant 0 : i32
    %86 = tpu.memref_slice %arg5[%c7_i32_62, %c0_i32_63] : memref<8x128xf32, #tpu.memory_space<vmem>> -> memref<1x128xf32, #tpu.memory_space<vmem>>
    %87 = tpu.memref_slice %arg6[%c7_i32_60] : memref<8x!tpu.dma_semaphore, #tpu.memory_space<semaphore_mem>> -> memref<1x!tpu.dma_semaphore, #tpu.memory_space<semaphore_mem>>
    %88 = tpu.memref_squeeze %87 : memref<1x!tpu.dma_semaphore, #tpu.memory_space<semaphore_mem>> -> memref<!tpu.dma_semaphore, #tpu.memory_space<semaphore_mem>>
    tpu.wait_dma2 semaphore(%88 : memref<!tpu.dma_semaphore, #tpu.memory_space<semaphore_mem>>) src(%85 : memref<1x128xf32, #tpu.memory_space<any>>) dst(%86 : memref<1x128xf32, #tpu.memory_space<vmem>>)
    %c0 = arith.constant 0 : index
    %c0_64 = arith.constant 0 : index
    %89 = vector.load %arg2[%c0, %c0_64] : memref<8x128xf32, #tpu.memory_space<vmem>>, vector<8x128xf32>
    %c0_65 = arith.constant 0 : index
    %c0_66 = arith.constant 0 : index
    %90 = vector.load %arg5[%c0_65, %c0_66] : memref<8x128xf32, #tpu.memory_space<vmem>>, vector<8x128xf32>
    %91 = arith.subf %89, %90 : vector<8x128xf32>
    %92 = arith.mulf %91, %91 : vector<8x128xf32>
    %cst = arith.constant dense<0.000000e+00> : vector<128xf32>
    %93 = vector.multi_reduction <add>, %92, %cst [0] : vector<8x128xf32> to vector<128xf32>
    %94 = vector.shape_cast %93 : vector<128xf32> to vector<1x128xf32>
    %95 = vector.shape_cast %94 : vector<1x128xf32> to vector<1x1x128xf32>
    %c0_67 = arith.constant 0 : index
    %c0_68 = arith.constant 0 : index
    %c0_69 = arith.constant 0 : index
    %96 = vector.load %arg4[%c0_67, %c0_68, %c0_69] : memref<1x1x128xf32, #tpu.memory_space<vmem>>, vector<1x1x128xf32>
    tpu.vector_store %arg4[%c0_67, %c0_68, %c0_69], %95 {strides = array<i32>} : memref<1x1x128xf32, #tpu.memory_space<vmem>>, vector<1x1x128xf32>,
    return
  }
  func.func @transform_0(%arg0: i32, %arg1: memref<8xi32, #tpu.memory_space<smem>>) -> (i32, i32) {
    %c0_i32 = arith.constant 0 : i32
    %c0_i32_0 = arith.constant 0 : i32
    return %arg0, %c0_i32 : i32, i32
  }
  func.func @transform_2(%arg0: i32, %arg1: memref<8xi32, #tpu.memory_space<smem>>) -> (i32, i32, i32) {
    %c0_i32 = arith.constant 0 : i32
    %c0_i32_0 = arith.constant 0 : i32
    %c0_i32_1 = arith.constant 0 : i32
    return %arg0, %c0_i32, %c0_i32_0 : i32, i32, i32
  }
}

</mosaic_0001>

<llo_original>
// kernel: tpu_custom_call.1
$region0: #{tpu_custom_call.1}
  #allocation0 [shape = 'u32[]', space=smem, size = 0x4, offset = 0x4, fixed_abs, tag = 'smem constant byte address 0x4 - core index']
  #allocation1 [shape = 'u32[144,128]{1,0:T(1,128)}', space=vmem, size = 0x12000, scoped, tag = 'internal scratch']
  #allocation2 [shape = 'f32[8,128]{1,0:T(8,128)}', space=vmem, size = 0x1000, scoped, tag = 'scratch operand']
  #allocation3 [shape = 's32[8]{0}', space=sflag, size = 0x20, scoped, tag = 'scratch operand']
  #allocation4 [shape = 's32[1]{0}', space=sflag, size = 0x4, scoped, tag = 'scoped memory for tpu_custom_call.1']
  #allocation5 [shape = 'u8[512]{0}', space=smem, size = 0x200, scoped, tag = 'prefetched SMEM operand 0']
  #allocation10 [shape = 's32[]', space=sflag, size = 0x4, offset = 0, fixed_abs, tag = 'sflag constant byte address 0x0 - dummy sync flag']
  #allocation11 [shape = 's32[]', space=sflag, size = 0x4, offset = 0, fixed_abs, tag = 'sflag constant byte address 0x0 - dummy sync flag']
  #allocation12 [shape = 'u32[]', space=smem, size = 0x4, offset = 0x44, fixed_abs, tag = 'smem constant byte address 0x44 - assertion arg 0']
  #allocation13 [shape = 'u32[]', space=smem, size = 0x4, offset = 0x48, fixed_abs, tag = 'smem constant byte address 0x48 - assertion arg 1']
  #allocation14 [shape = 's32[]', space=sflag, size = 0x4, offset = 0, fixed_abs, tag = 'sflag constant byte address 0x0 - dummy sync flag']
  #allocation15 [shape = 's32[]', space=sflag, size = 0x4, offset = 0, fixed_abs, tag = 'sflag constant byte address 0x0 - dummy sync flag']
  #allocation16 [shape = 's32[]', space=sflag, size = 0x4, offset = 0, fixed_abs, tag = 'sflag constant byte address 0x0 - dummy sync flag']
  #allocation17 [shape = 's32[]', space=sflag, size = 0x4, offset = 0, fixed_abs, tag = 'sflag constant byte address 0x0 - dummy sync flag']
  #allocation18 [shape = 's32[]', space=sflag, size = 0x4, offset = 0, fixed_abs, tag = 'sflag constant byte address 0x0 - dummy sync flag']
  #allocation19 [shape = 's32[]', space=sflag, size = 0x4, offset = 0, fixed_abs, tag = 'sflag constant byte address 0x0 - dummy sync flag']
  #allocation20 [shape = 's32[]', space=sflag, size = 0x4, offset = 0, fixed_abs, tag = 'sflag constant byte address 0x0 - dummy sync flag']
  #allocation21 [shape = 's32[]', space=sflag, size = 0x4, offset = 0, fixed_abs, tag = 'sflag constant byte address 0x0 - dummy sync flag']
  #allocation22 [shape = 's32[]', space=sflag, size = 0x4, offset = 0, fixed_abs, tag = 'sflag constant byte address 0x0 - dummy sync flag']
  #allocation23 [shape = 's32[]', space=sflag, size = 0x4, offset = 0, fixed_abs, tag = 'sflag constant byte address 0x0 - dummy sync flag']
  #allocation24 [shape = 's32[]', space=sflag, size = 0x4, offset = 0, fixed_abs, tag = 'sflag constant byte address 0x0 - dummy sync flag']
  #allocation25 [shape = 's32[]', space=sflag, size = 0x4, offset = 0, fixed_abs, tag = 'sflag constant byte address 0x0 - dummy sync flag']
  #allocation26 [shape = 's32[]', space=sflag, size = 0x4, offset = 0, fixed_abs, tag = 'sflag constant byte address 0x0 - dummy sync flag']
  #allocation27 [shape = 's32[]', space=sflag, size = 0x4, offset = 0, fixed_abs, tag = 'sflag constant byte address 0x0 - dummy sync flag']
  %s0 = inlined_call_operand.hbm [shape: s32[8], index: 0, kind: input, shape index: {}]
  %s1 = inlined_call_operand.hbm [shape: f32[8,128], index: 1, kind: input, shape index: {}]
  %s2 = inlined_call_operand.hbm [shape: f32[10,128], index: 2, kind: input, shape index: {}]
  %s3 = inlined_call_operand.hbm [shape: f32[1,1,128], index: 3, kind: output, shape index: {}]
  %s4 = sld [smem:[#allocation0]]
  $region50: #{tpu_custom_call.1} parent=0
    _
  %s6 = ssub.s32 1, %s4
  %s7 = scalar_select 0, %s6, %s4
  %9 = dma.hbm_to_smem %s0, 16, [#allocation5], [#allocation4]
  %10 = dma.done [#allocation4], 16
  %11 = sfence
  $region1: #{tpu_custom_call.1} parent=0
    #allocation6 [shape = 'u8[4096]{0}', space=vmem, size = 0x1000, scoped, tag = 'input window, operand 1, single buffered']
    #allocation7 [shape = 's32[1]{0}', space=sflag, size = 0x4, scoped, tag = 'scoped memory for tpu_custom_call.1']
    #allocation8 [shape = 's32[1]{0}', space=sflag, size = 0x4, scoped, tag = 'scoped memory for tpu_custom_call.1']
    #allocation9 [shape = 'u8[512]{0}', space=vmem, size = 0x400, scoped, tag = 'output window, operand 0, single buffered']
    %12 = vsyncpa [#allocation7], 0
    %13 = vsyncpa [#allocation8], 0
    // Predicated region
    $region2: #{tpu_custom_call.1} parent=1 // pred_check
      _
    $region3: #{tpu_custom_call.1} parent=1 // pred_check_branch
      %15 = sbr.rel (0) target = $region5
    $region4: #{tpu_custom_call.1} parent=1 // pred_region
      %s17 = ssub.s32 128, 128
      %18 = vsyncadd [#allocation7], %s17
      %s20 = sshll.u32 [#allocation6], 4
      %s21 = int_to_ptr.vmem [resolvable:$true] %s20
      %23 = dma.hbm_to_vmem [thread:$0]  %s1, 128, %s21, [#allocation7]
    $region5: #{tpu_custom_call.1} parent=1 // pred_fallthru
      _
    // Predicated region
    $region6: #{tpu_custom_call.1} parent=1 // pred_check
      _
    $region7: #{tpu_custom_call.1} parent=1 // pred_check_branch
      %25 = sbr.rel (0) target = $region9
    $region8: #{tpu_custom_call.1} parent=1 // pred_region
      %26 = dma.done [#allocation7], 128
    $region9: #{tpu_custom_call.1} parent=1 // pred_fallthru
      _
    %s27 = smul.u32 0, 8
    %s28 = sld [smem:[#allocation5 + %s27]]
    %s29 = smul.addr %s28, 16
    %s30 = scalar_lea.hbm %s2, %s29
    // Predicated region
    $region10: #{tpu_custom_call.1} parent=1 // pred_check
      _
    $region11: #{tpu_custom_call.1} parent=1 // pred_check_branch
      %32 = sbr.rel target = $region13
    $region12: #{tpu_custom_call.1} parent=1 // pred_region
      %33 = sst [smem:[#allocation12]] [#allocation11]
      %34 = sst [smem:[#allocation13]] [#allocation10]
    $region13: #{tpu_custom_call.1} parent=1 // pred_fallthru
      _
    %36 = shalt.err (0)
    %s38 = sshll.u32 [#allocation2], 4
    %s39 = int_to_ptr.vmem [resolvable:$true] %s38
    %41 = dma.hbm_to_vmem [thread:$0]  %s30, 16, %s39, [#allocation3]
    %s42 = sadd.s32 %s27, 1
    %s43 = sld [smem:[#allocation5 + %s42]]
    %s44 = smul.addr %s43, 16
    %s45 = scalar_lea.hbm %s2, %s44
    %s46 = scalar_lea.vmem [#allocation2], 1
    %s47 = scalar_lea.sflag [#allocation3], 1
    // Predicated region
    $region14: #{tpu_custom_call.1} parent=1 // pred_check
      _
    $region15: #{tpu_custom_call.1} parent=1 // pred_check_branch
      %49 = sbr.rel target = $region17
    $region16: #{tpu_custom_call.1} parent=1 // pred_region
      %50 = sst [smem:[#allocation12]] [#allocation15]
      %51 = sst [smem:[#allocation13]] [#allocation14]
    $region17: #{tpu_custom_call.1} parent=1 // pred_fallthru
      _
    %53 = shalt.err (0)
    %s55 = sshll.u32 %s46, 4
    %s56 = int_to_ptr.vmem [resolvable:$true] %s55
    %58 = dma.hbm_to_vmem [thread:$0]  %s45, 16, %s56, %s47
    %s59 = sadd.s32 %s27, 2
    %s60 = sld [smem:[#allocation5 + %s59]]
    %s61 = smul.addr %s60, 16
    %s62 = scalar_lea.hbm %s2, %s61
    %s63 = scalar_lea.vmem [#allocation2], 2
    %s64 = scalar_lea.sflag [#allocation3], 2
    // Predicated region
    $region18: #{tpu_custom_call.1} parent=1 // pred_check
      _
    $region19: #{tpu_custom_call.1} parent=1 // pred_check_branch
      %66 = sbr.rel target = $region21
    $region20: #{tpu_custom_call.1} parent=1 // pred_region
      %67 = sst [smem:[#allocation12]] [#allocation17]
      %68 = sst [smem:[#allocation13]] [#allocation16]
    $region21: #{tpu_custom_call.1} parent=1 // pred_fallthru
      _
    %70 = shalt.err (0)
    %s72 = sshll.u32 %s63, 4
    %s73 = int_to_ptr.vmem [resolvable:$true] %s72
    %75 = dma.hbm_to_vmem [thread:$0]  %s62, 16, %s73, %s64
    %s76 = sadd.s32 %s27, 3
    %s77 = sld [smem:[#allocation5 + %s76]]
    %s78 = smul.addr %s77, 16
    %s79 = scalar_lea.hbm %s2, %s78
    %s80 = scalar_lea.vmem [#allocation2], 3
    %s81 = scalar_lea.sflag [#allocation3], 3
    // Predicated region
    $region22: #{tpu_custom_call.1} parent=1 // pred_check
      _
    $region23: #{tpu_custom_call.1} parent=1 // pred_check_branch
      %83 = sbr.rel target = $region25
    $region24: #{tpu_custom_call.1} parent=1 // pred_region
      %84 = sst [smem:[#allocation12]] [#allocation19]
      %85 = sst [smem:[#allocation13]] [#allocation18]
    $region25: #{tpu_custom_call.1} parent=1 // pred_fallthru
      _
    %87 = shalt.err (0)
    %s89 = sshll.u32 %s80, 4
    %s90 = int_to_ptr.vmem [resolvable:$true] %s89
    %92 = dma.hbm_to_vmem [thread:$0]  %s79, 16, %s90, %s81
    %s93 = sadd.s32 %s27, 4
    %s94 = sld [smem:[#allocation5 + %s93]]
    %s95 = smul.addr %s94, 16
    %s96 = scalar_lea.hbm %s2, %s95
    %s97 = scalar_lea.vmem [#allocation2], 4
    %s98 = scalar_lea.sflag [#allocation3], 4
    // Predicated region
    $region26: #{tpu_custom_call.1} parent=1 // pred_check
      _
    $region27: #{tpu_custom_call.1} parent=1 // pred_check_branch
      %100 = sbr.rel target = $region29
    $region28: #{tpu_custom_call.1} parent=1 // pred_region
      %101 = sst [smem:[#allocation12]] [#allocation21]
      %102 = sst [smem:[#allocation13]] [#allocation20]
    $region29: #{tpu_custom_call.1} parent=1 // pred_fallthru
      _
    %104 = shalt.err (0)
    %s106 = sshll.u32 %s97, 4
    %s107 = int_to_ptr.vmem [resolvable:$true] %s106
    %109 = dma.hbm_to_vmem [thread:$0]  %s96, 16, %s107, %s98
    %s110 = sadd.s32 %s27, 5
    %s111 = sld [smem:[#allocation5 + %s110]]
    %s112 = smul.addr %s111, 16
    %s113 = scalar_lea.hbm %s2, %s112
    %s114 = scalar_lea.vmem [#allocation2], 5
    %s115 = scalar_lea.sflag [#allocation3], 5
    // Predicated region
    $region30: #{tpu_custom_call.1} parent=1 // pred_check
      _
    $region31: #{tpu_custom_call.1} parent=1 // pred_check_branch
      %117 = sbr.rel target = $region33
    $region32: #{tpu_custom_call.1} parent=1 // pred_region
      %118 = sst [smem:[#allocation12]] [#allocation23]
      %119 = sst [smem:[#allocation13]] [#allocation22]
    $region33: #{tpu_custom_call.1} parent=1 // pred_fallthru
      _
    %121 = shalt.err (0)
    %s123 = sshll.u32 %s114, 4
    %s124 = int_to_ptr.vmem [resolvable:$true] %s123
    %126 = dma.hbm_to_vmem [thread:$0]  %s113, 16, %s124, %s115
    %s127 = sadd.s32 %s27, 6
    %s128 = sld [smem:[#allocation5 + %s127]]
    %s129 = smul.addr %s128, 16
    %s130 = scalar_lea.hbm %s2, %s129
    %s131 = scalar_lea.vmem [#allocation2], 6
    %s132 = scalar_lea.sflag [#allocation3], 6
    // Predicated region
    $region34: #{tpu_custom_call.1} parent=1 // pred_check
      _
    $region35: #{tpu_custom_call.1} parent=1 // pred_check_branch
      %134 = sbr.rel target = $region37
    $region36: #{tpu_custom_call.1} parent=1 // pred_region
      %135 = sst [smem:[#allocation12]] [#allocation25]
      %136 = sst [smem:[#allocation13]] [#allocation24]
    $region37: #{tpu_custom_call.1} parent=1 // pred_fallthru
      _
    %138 = shalt.err (0)
    %s140 = sshll.u32 %s131, 4
    %s141 = int_to_ptr.vmem [resolvable:$true] %s140
    %143 = dma.hbm_to_vmem [thread:$0]  %s130, 16, %s141, %s132
    %s144 = sadd.s32 %s27, 7
    %s145 = sld [smem:[#allocation5 + %s144]]
    %s146 = smul.addr %s145, 16
    %s147 = scalar_lea.hbm %s2, %s146
    %s148 = scalar_lea.vmem [#allocation2], 7
    %s149 = scalar_lea.sflag [#allocation3], 7
    // Predicated region
    $region38: #{tpu_custom_call.1} parent=1 // pred_check
      _
    $region39: #{tpu_custom_call.1} parent=1 // pred_check_branch
      %151 = sbr.rel target = $region41
    $region40: #{tpu_custom_call.1} parent=1 // pred_region
      %152 = sst [smem:[#allocation12]] [#allocation27]
      %153 = sst [smem:[#allocation13]] [#allocation26]
    $region41: #{tpu_custom_call.1} parent=1 // pred_fallthru
      _
    %155 = shalt.err (0)
    %s157 = sshll.u32 %s148, 4
    %s158 = int_to_ptr.vmem [resolvable:$true] %s157
    %160 = dma.hbm_to_vmem [thread:$0]  %s147, 16, %s158, %s149
    %s161 = smul.u32 1, 1
    %s162 = sshll.u32 %s161, 4
    %163 = dma.done [#allocation3], %s162
    %s164 = sshll.u32 %s161, 4
    %165 = dma.done %s47, %s164
    %s166 = sshll.u32 %s161, 4
    %167 = dma.done %s64, %s166
    %s168 = sshll.u32 %s161, 4
    %169 = dma.done %s81, %s168
    %s170 = sshll.u32 %s161, 4
    %171 = dma.done %s98, %s170
    %s172 = sshll.u32 %s161, 4
    %173 = dma.done %s115, %s172
    %s174 = sshll.u32 %s161, 4
    %175 = dma.done %s132, %s174
    %s176 = sshll.u32 %s161, 4
    %177 = dma.done %s149, %s176
    %v178 = vld [vmem:[#allocation6] sm:$0xff]
    %v179 = vld [vmem:[#allocation2] sm:$0xff]
    %v180 = vsub.f32 %v178, %v179
    %v181 = vmul.f32 %v180, %v180
    %v182 = vrot.slane %v181, 4
    %v183 = vadd.f32 %v181, %v182
    %v184 = vrot.slane %v183, 2
    %v185 = vadd.f32 %v183, %v184
    %v186 = vrot.slane %v185, 1
    %v187 = vadd.f32 %v185, %v186
    %188 = vst [vmem:[#allocation9] sm:$0x1] %v187
    // Predicated region
    $region42: #{tpu_custom_call.1} parent=1 // pred_check
      _
    $region43: #{tpu_custom_call.1} parent=1 // pred_check_branch
      %190 = sbr.rel (0) target = $region45
    $region44: #{tpu_custom_call.1} parent=1 // pred_region
      %s192 = ssub.s32 16, 16
      %193 = vsyncadd [#allocation8], %s192
      %s195 = sshll.u32 [#allocation9], 4
      %s196 = int_to_ptr.vmem [resolvable:$true] %s195
      %198 = dma.vmem_to_hbm [thread:$0]  %s196, 16, %s3, [#allocation8]
    $region45: #{tpu_custom_call.1} parent=1 // pred_fallthru
      _
    // Predicated region
    $region46: #{tpu_custom_call.1} parent=1 // pred_check
      _
    $region47: #{tpu_custom_call.1} parent=1 // pred_check_branch
      %200 = sbr.rel (0) target = $region49
    $region48: #{tpu_custom_call.1} parent=1 // pred_region
      %201 = dma.done [#allocation8], 16
    $region49: #{tpu_custom_call.1} parent=1 // pred_fallthru
      _
    %202 = vsyncpa [#allocation7], 1
    %203 = vsyncpa [#allocation8], 1
  %204 = vsyncmov [#allocation3]
  %s205 = vpop.sfrf %204
  %p206 = scmp.eq.s32.totalorder %s205, 0
  %p207 = pneg %p206
  %209 = shalt.err (%p207)
  %s210 = scalar_lea.sflag [#allocation3], 1
  %211 = vsyncmov %s210
  %s212 = vpop.sfrf %211
  %p213 = scmp.eq.s32.totalorder %s212, 0
  %p214 = pneg %p213
  %216 = shalt.err (%p214)
  %s217 = scalar_lea.sflag [#allocation3], 2
  %218 = vsyncmov %s217
  %s219 = vpop.sfrf %218
  %p220 = scmp.eq.s32.totalorder %s219, 0
  %p221 = pneg %p220
  %223 = shalt.err (%p221)
  %s224 = scalar_lea.sflag [#allocation3], 3
  %225 = vsyncmov %s224
  %s226 = vpop.sfrf %225
  %p227 = scmp.eq.s32.totalorder %s226, 0
  %p228 = pneg %p227
  %230 = shalt.err (%p228)
  %s231 = scalar_lea.sflag [#allocation3], 4
  %232 = vsyncmov %s231
  %s233 = vpop.sfrf %232
  %p234 = scmp.eq.s32.totalorder %s233, 0
  %p235 = pneg %p234
  %237 = shalt.err (%p235)
  %s238 = scalar_lea.sflag [#allocation3], 5
  %239 = vsyncmov %s238
  %s240 = vpop.sfrf %239
  %p241 = scmp.eq.s32.totalorder %s240, 0
  %p242 = pneg %p241
  %244 = shalt.err (%p242)
  %s245 = scalar_lea.sflag [#allocation3], 6
  %246 = vsyncmov %s245
  %s247 = vpop.sfrf %246
  %p248 = scmp.eq.s32.totalorder %s247, 0
  %p249 = pneg %p248
  %251 = shalt.err (%p249)
  %s252 = scalar_lea.sflag [#allocation3], 7
  %253 = vsyncmov %s252
  %s254 = vpop.sfrf %253
  %p255 = scmp.eq.s32.totalorder %s254, 0
  %p256 = pneg %p255
  %258 = shalt.err (%p256)

</llo_original>
